<compile_context>
chip_gen: v5e
topology: v5e:2x2
jax: 0.10.0
libtpu: 0.0.40
codegen_flags: <defaults>
</compile_context>

<pallas_src>
import functools

import jax
import jax.numpy as jnp
from jax.experimental import pallas as pl
from jax.experimental.pallas import tpu as pltpu


def _detection_head_kernel(x_ref, w_ref, b_ref, cls_ref, box_ref, conf_ref, *,
                           cls_width, box_width, conf_width):
    """One fused MXU push over the lane-padded weight; per-head writes.

    Sigmoid is applied only to the confidence lanes (EUP slot); the padded
    lanes of the accumulator never leave VMEM.
    """
    y = jnp.dot(x_ref[...], w_ref[...], preferred_element_type=jnp.float32)
    y = y + b_ref[...]                                    # (block_b, padded) f32
    conf_start = cls_width + box_width
    cls_ref[...] = y[:, :cls_width]
    box_ref[...] = y[:, cls_width:conf_start]
    conf_ref[...] = jax.nn.sigmoid(y[:, conf_start:conf_start + conf_width])


def pack_detection_head_params(params, compute_dtype=jnp.bfloat16):
    """Fuse the three linear heads into one lane-padded weight/bias pair.

    Weights are stored transposed, (in_features, out_features).  The fused
    weight is cast to `compute_dtype` (bf16 by default) to halve its HBM
    stream; the bias stays f32 and is added to the f32 MXU accumulator.
    """
    wc, bc = params["classifier"]          # (F, num_classes*num_boxes), (1, ...)
    wb, bb = params["box_predictor"]       # (F, 4*num_boxes)
    wf, bf = params["confidence"]          # (F, num_boxes)

    widths = (wc.shape[1], wb.shape[1], wf.shape[1])
    w = jnp.concatenate([wc, wb, wf], axis=1)             # (F, total)
    b = jnp.concatenate([bc, bb, bf], axis=1)             # (1, total)
    total = w.shape[1]
    padded = ((total + 127) // 128) * 128                 # lane-dense matmul width
    if padded != total:
        w = jnp.pad(w, ((0, 0), (0, padded - total)))
        b = jnp.pad(b, ((0, 0), (0, padded - total)))
    return {
        "w": w.astype(compute_dtype),
        "b": b.astype(jnp.float32),
        "widths": widths,
        "padded": padded,
    }


def _batch_dim_semantics(num_blocks, batch, block_b):
    """Grid-axis semantics for the batch axis.

    On multi-TensorCore chips (v7x) CORE_PARALLEL genuinely shards the grid
    across cores; plain "parallel" vs "arbitrary" barely changes codegen.
    Gated on the detected core count and an even split, so v5e/v6e (1 TC),
    unknown environments, and ragged batches keep the portable path.
    """
    if num_blocks < 2:
        return ("arbitrary",)
    num_cores = 1
    try:
        info = pltpu.get_tpu_info()
        for attr in ("num_cores", "core_count", "num_tensorcores"):
            val = getattr(info, attr, None)
            if isinstance(val, int) and val > 0:
                num_cores = val
                break
    except Exception:
        num_cores = 1
    if num_cores > 1 and batch % block_b == 0 and num_blocks % num_cores == 0:
        return (pltpu.CORE_PARALLEL,)
    return ("parallel",)


def detection_head_forward(x, packed, num_classes, num_boxes, *, block_b=None):
    """x: (B, in_features). Returns (class_logits, bounding_boxes, conf_scores)."""
    B, F = x.shape
    w, b = packed["w"], packed["b"]
    padded = packed["padded"]
    cls_width, box_width, conf_width = packed["widths"]

    # Batch tile: 512 rows (multiple of 256) keeps per-step DMA well above the
    # ~0.35 us/step overhead and is still tiny in VMEM at F=32 (double-buffered
    # bf16 x tile ~64 KiB; f32 output tiles ~370 KiB).
    if block_b is None:
        block_b = B if B <= 512 else 512
    grid_b = pl.cdiv(B, block_b)

    x = x.astype(w.dtype)  # bf16 input stream; f32 accumulation inside the kernel

    kernel = functools.partial(
        _detection_head_kernel,
        cls_width=cls_width, box_width=box_width, conf_width=conf_width)

    cls_flat, box_flat, conf_flat = pl.pallas_call(
        kernel,
        out_shape=(
            jax.ShapeDtypeStruct((B, cls_width), jnp.float32),
            jax.ShapeDtypeStruct((B, box_width), jnp.float32),
            jax.ShapeDtypeStruct((B, conf_width), jnp.float32),
        ),
        grid=(grid_b,),
        in_specs=[
            pl.BlockSpec((block_b, F), lambda i: (i, 0)),   # activations (tiled on B)
            pl.BlockSpec((F, padded), lambda i: (0, 0)),    # fused weight (resident)
            pl.BlockSpec((1, padded), lambda i: (0, 0)),    # fused bias   (resident)
        ],
        out_specs=(
            pl.BlockSpec((block_b, cls_width), lambda i: (i, 0)),
            pl.BlockSpec((block_b, box_width), lambda i: (i, 0)),
            pl.BlockSpec((block_b, conf_width), lambda i: (i, 0)),
        ),
        compiler_params=pltpu.CompilerParams(
            dimension_semantics=_batch_dim_semantics(grid_b, B, block_b)),
    )(x, w, b)

    # Pure metadata reshapes (match the torch .view calls); no extra HBM pass.
    class_logits = cls_flat.reshape(-1, num_boxes, num_classes)
    bounding_boxes = box_flat.reshape(-1, num_boxes, 4)
    conf_scores = conf_flat.reshape(-1, num_boxes)
    return class_logits, bounding_boxes, conf_scores


def init_params(key, in_features, num_classes, num_boxes):
    """Deterministic init mimicking nn.Linear's U(-1/sqrt(fan_in), 1/sqrt(fan_in)).
    Weights are stored transposed: (in_features, out_features)."""
    bound = 1.0 / jnp.sqrt(jnp.float32(in_features))

    def linear(k, out_features):
        kw, kb = jax.random.split(k)
        w = jax.random.uniform(kw, (in_features, out_features), jnp.float32,
                               minval=-bound, maxval=bound)
        b = jax.random.uniform(kb, (1, out_features), jnp.float32,
                               minval=-bound, maxval=bound)
        return w, b

    k1, k2, k3 = jax.random.split(key, 3)
    return {
        "classifier": linear(k1, num_classes * num_boxes),
        "box_predictor": linear(k2, 4 * num_boxes),
        "confidence": linear(k3, num_boxes),
    }


if __name__ == "__main__":
    in_features = 32
    num_classes = 5
    num_boxes = 9
    batch = 8

    key = jax.random.PRNGKey(0)
    kx, kp, kx2 = jax.random.split(key, 3)
    x = jax.random.normal(kx, (batch, in_features), jnp.float32)
    params = init_params(kp, in_features, num_classes, num_boxes)

    # One-time param packing (weight fusion + lane padding + bf16 cast).
    packed = pack_detection_head_params(params)

    fwd = jax.jit(lambda xx: detection_head_forward(xx, packed, num_classes, num_boxes))
    class_logits, bounding_boxes, conf_scores = fwd(x)
    jax.block_until_ready((class_logits, bounding_boxes, conf_scores))

    assert class_logits.shape == (batch, num_boxes, num_classes)
    assert bounding_boxes.shape == (batch, num_boxes, 4)
    assert conf_scores.shape == (batch, num_boxes)

    # Pure-JAX f32 reference on the original (unfused) params.  Tolerance covers
    # the bf16 activation/weight cast (f32 accumulation inside the kernel).
    def reference(xx):
        wc, bc = params["classifier"]
        wb, bb = params["box_predictor"]
        wf, bf = params["confidence"]
        rc = (xx @ wc + bc).reshape(-1, num_boxes, num_classes)
        rb = (xx @ wb + bb).reshape(-1, num_boxes, 4)
        rf = jax.nn.sigmoid(xx @ wf + bf).reshape(-1, num_boxes)
        return rc, rb, rf

    ref_cls, ref_box, ref_conf = reference(x)
    assert jnp.allclose(class_logits, ref_cls, atol=2e-2, rtol=2e-2)
    assert jnp.allclose(bounding_boxes, ref_box, atol=2e-2, rtol=2e-2)
    assert jnp.allclose(conf_scores, ref_conf, atol=1e-2)

    # Partial-last-block check (reviewer concern): B not a multiple of block_b.
    batch2 = 20
    x2 = jax.random.normal(kx2, (batch2, in_features), jnp.float32)
    cls2, box2, conf2 = jax.jit(
        lambda xx: detection_head_forward(xx, packed, num_classes, num_boxes, block_b=8)
    )(x2)
    jax.block_until_ready((cls2, box2, conf2))
    r_cls2, r_box2, r_conf2 = reference(x2)
    assert cls2.shape == (batch2, num_boxes, num_classes)
    assert box2.shape == (batch2, num_boxes, 4)
    assert conf2.shape == (batch2, num_boxes)
    assert jnp.allclose(cls2, r_cls2, atol=2e-2, rtol=2e-2)
    assert jnp.allclose(box2, r_box2, atol=2e-2, rtol=2e-2)
    assert jnp.allclose(conf2, r_conf2, atol=1e-2)

    print("KERNEL_OK")
</pallas_src>

<mosaic_0001>
module attributes {stable_mosaic.version = 11 : i64} {
  func.func @_detection_head_kernel(%arg0: i32, %arg1: memref<8x32xbf16, #tpu.memory_space<vmem>>, %arg2: memref<32x128xbf16, #tpu.memory_space<vmem>>, %arg3: memref<1x128xf32, #tpu.memory_space<vmem>>, %arg4: memref<8x45xf32, #tpu.memory_space<vmem>>, %arg5: memref<8x36xf32, #tpu.memory_space<vmem>>, %arg6: memref<8x9xf32, #tpu.memory_space<vmem>>) attributes {dimension_semantics = [#tpu.dimension_semantics<arbitrary>], iteration_bounds = array<i64: 1>, scalar_prefetch = 0 : i64, scratch_operands = 0 : i64, tpu.core_type = #tpu.core_type<tc>, window_params = [{transform_indices = @transform_0, window_bounds = array<i64: 8, 32>}, {pipeline_mode = #tpu.pipeline_mode<synchronous>, transform_indices = @transform_1, window_bounds = array<i64: 32, 128>}, {pipeline_mode = #tpu.pipeline_mode<synchronous>, transform_indices = @transform_2, window_bounds = array<i64: 1, 128>}, {transform_indices = @transform_3, window_bounds = array<i64: 8, 45>}, {transform_indices = @transform_4, window_bounds = array<i64: 8, 36>}, {transform_indices = @transform_5, window_bounds = array<i64: 8, 9>}]} {
    %c0 = arith.constant 0 : index
    %c0_0 = arith.constant 0 : index
    %0 = vector.load %arg1[%c0, %c0_0] : memref<8x32xbf16, #tpu.memory_space<vmem>>, vector<8x32xbf16>
    %c0_1 = arith.constant 0 : index
    %c0_2 = arith.constant 0 : index
    %1 = vector.load %arg2[%c0_1, %c0_2] : memref<32x128xbf16, #tpu.memory_space<vmem>>, vector<32x128xbf16>
    %cst = arith.constant dense<0.000000e+00> : vector<8x128xf32>
    %2 = tpu.matmul %0, %1, %cst {dimension_numbers = #tpu.dot_dimension_numbers<[1], [0], [0], [1], [0, 0, 1, 1], [], []>} : vector<8x32xbf16>, vector<32x128xbf16>, vector<8x128xf32> -> vector<8x128xf32>
    %c0_3 = arith.constant 0 : index
    %c0_4 = arith.constant 0 : index
    %3 = vector.load %arg3[%c0_3, %c0_4] : memref<1x128xf32, #tpu.memory_space<vmem>>, vector<1x128xf32>
    %4 = vector.broadcast %3 : vector<1x128xf32> to vector<8x128xf32>
    %5 = arith.addf %2, %4 : vector<8x128xf32>
    %6 = vector.extract_strided_slice %5 {offsets = [0, 0], sizes = [8, 45], strides = [1, 1]} : vector<8x128xf32> to vector<8x45xf32>
    %c0_5 = arith.constant 0 : index
    %c0_6 = arith.constant 0 : index
    %7 = vector.load %arg4[%c0_5, %c0_6] : memref<8x45xf32, #tpu.memory_space<vmem>>, vector<8x45xf32>
    tpu.vector_store %arg4[%c0_5, %c0_6], %6 {strides = array<i32>} : memref<8x45xf32, #tpu.memory_space<vmem>>, vector<8x45xf32>,
    %8 = vector.extract_strided_slice %5 {offsets = [0, 45], sizes = [8, 36], strides = [1, 1]} : vector<8x128xf32> to vector<8x36xf32>
    %c0_7 = arith.constant 0 : index
    %c0_8 = arith.constant 0 : index
    %9 = vector.load %arg5[%c0_7, %c0_8] : memref<8x36xf32, #tpu.memory_space<vmem>>, vector<8x36xf32>
    tpu.vector_store %arg5[%c0_7, %c0_8], %8 {strides = array<i32>} : memref<8x36xf32, #tpu.memory_space<vmem>>, vector<8x36xf32>,
    %10 = vector.extract_strided_slice %5 {offsets = [0, 81], sizes = [8, 9], strides = [1, 1]} : vector<8x128xf32> to vector<8x9xf32>
    %11 = arith.negf %10 : vector<8x9xf32>
    %12 = math.exp %11 : vector<8x9xf32>
    %cst_9 = arith.constant 1.000000e+00 : f32
    %13 = vector.broadcast %cst_9 : f32 to vector<8x9xf32>
    %14 = arith.addf %13, %12 : vector<8x9xf32>
    %15 = arith.divf %13, %14 : vector<8x9xf32>
    %c0_10 = arith.constant 0 : index
    %c0_11 = arith.constant 0 : index
    %16 = vector.load %arg6[%c0_10, %c0_11] : memref<8x9xf32, #tpu.memory_space<vmem>>, vector<8x9xf32>
    tpu.vector_store %arg6[%c0_10, %c0_11], %15 {strides = array<i32>} : memref<8x9xf32, #tpu.memory_space<vmem>>, vector<8x9xf32>,
    return
  }
  func.func @transform_0(%arg0: i32) -> (i32, i32) {
    %c0_i32 = arith.constant 0 : i32
    %c0_i32_0 = arith.constant 0 : i32
    return %arg0, %c0_i32 : i32, i32
  }
  func.func @transform_1(%arg0: i32) -> (i32, i32) {
    %c0_i32 = arith.constant 0 : i32
    %c0_i32_0 = arith.constant 0 : i32
    %c0_i32_1 = arith.constant 0 : i32
    return %c0_i32, %c0_i32_0 : i32, i32
  }
  func.func @transform_2(%arg0: i32) -> (i32, i32) {
    %c0_i32 = arith.constant 0 : i32
    %c0_i32_0 = arith.constant 0 : i32
    %c0_i32_1 = arith.constant 0 : i32
    return %c0_i32, %c0_i32_0 : i32, i32
  }
  func.func @transform_3(%arg0: i32) -> (i32, i32) {
    %c0_i32 = arith.constant 0 : i32
    %c0_i32_0 = arith.constant 0 : i32
    return %arg0, %c0_i32 : i32, i32
  }
  func.func @transform_4(%arg0: i32) -> (i32, i32) {
    %c0_i32 = arith.constant 0 : i32
    %c0_i32_0 = arith.constant 0 : i32
    return %arg0, %c0_i32 : i32, i32
  }
  func.func @transform_5(%arg0: i32) -> (i32, i32) {
    %c0_i32 = arith.constant 0 : i32
    %c0_i32_0 = arith.constant 0 : i32
    return %arg0, %c0_i32 : i32, i32
  }
}

</mosaic_0001>

<llo_original>
// kernel: _lambda_.1
$region0: #{_lambda_.1}
  #allocation0 [shape = 'u32[]', space=smem, size = 0x4, offset = 0x4, fixed_abs, tag = 'smem constant byte address 0x4 - core index']
  #allocation1 [shape = 'u32[72,128]{1,0:T(1,128)}', space=vmem, size = 0x9000, scoped, tag = 'internal scratch']
  %s0 = inlined_call_operand.vmem [shape: bf16[8,32], index: 0, kind: input, shape index: {}]
  %s1 = inlined_call_operand.hbm [shape: bf16[32,128], index: 1, kind: input, shape index: {}]
  %s2 = inlined_call_operand.vmem [shape: f32[1,128], index: 2, kind: input, shape index: {}]
  %s3 = inlined_call_operand.vmem [shape: f32[8,45], index: 3, kind: output, shape index: {0}]
  %s4 = inlined_call_operand.vmem [shape: f32[8,36], index: 4, kind: output, shape index: {1}]
  %s5 = inlined_call_operand.hbm [shape: f32[8,9], index: 5, kind: output, shape index: {2}]
  %6 = xla_tuple %s3, %s4, %s5
  %s7 = sld [smem:[#allocation0]]
  $region42: #{_lambda_.1} parent=0
    _
  %s9 = ssub.s32 1, %s7
  %s10 = scalar_select 0, %s9, %s7
  $region1: #{_lambda_.1} parent=0
    #allocation2 [shape = 'u8[8192]{0}', space=vmem, size = 0x2000, scoped, tag = 'input window, operand 1, single buffered']
    #allocation3 [shape = 's32[1]{0}', space=sflag, size = 0x4, scoped, tag = 'scoped memory for _lambda_.1']
    #allocation4 [shape = 's32[1]{0}', space=sflag, size = 0x4, scoped, tag = 'scoped memory for _lambda_.1']
    #allocation5 [shape = 'u8[4096]{0}', space=vmem, size = 0x1000, scoped, tag = 'output window, operand 2, single buffered']
    %11 = vsyncpa [#allocation3], 0
    %12 = vsyncpa [#allocation4], 0
    // Predicated region
    $region2: #{_lambda_.1} parent=1 // pred_check
      _
    $region3: #{_lambda_.1} parent=1 // pred_check_branch
      %14 = sbr.rel (0) target = $region5
    $region4: #{_lambda_.1} parent=1 // pred_region
      _
    $region5: #{_lambda_.1} parent=1 // pred_fallthru
      _
    // Predicated region
    $region6: #{_lambda_.1} parent=1 // pred_check
      _
    $region7: #{_lambda_.1} parent=1 // pred_check_branch
      %16 = sbr.rel (0) target = $region9
    $region8: #{_lambda_.1} parent=1 // pred_region
      %18 = vsyncadd [#allocation3], 0
      %s19 = sshll.u32 %s1, 4
      %s20 = int_to_ptr.hbm [resolvable:$true] %s19
      %s21 = sshll.u32 [#allocation2], 4
      %s22 = int_to_ptr.vmem [resolvable:$true] %s21
      %27 = dma.hbm_to_vmem [thread:$0]  %s20, 256, %s22, [#allocation3], 64, 64, 4
    $region9: #{_lambda_.1} parent=1 // pred_fallthru
      _
    // Predicated region
    $region10: #{_lambda_.1} parent=1 // pred_check
      _
    $region11: #{_lambda_.1} parent=1 // pred_check_branch
      %29 = sbr.rel (0) target = $region13
    $region12: #{_lambda_.1} parent=1 // pred_region
      _
    $region13: #{_lambda_.1} parent=1 // pred_fallthru
      _
    // Predicated region
    $region14: #{_lambda_.1} parent=1 // pred_check
      _
    $region15: #{_lambda_.1} parent=1 // pred_check_branch
      %31 = sbr.rel (0) target = $region17
    $region16: #{_lambda_.1} parent=1 // pred_region
      %33 = dma.done [#allocation3], 256
    $region17: #{_lambda_.1} parent=1 // pred_fallthru
      _
    %v35 = vld [vmem:[%s0] sm:$0xf]
    %v36 = vld [vmem:[#allocation2] sm:$0xf]
    %v37 = vld [vmem:[#allocation2 + $0x4] sm:$0xf]
    %v38 = vld [vmem:[#allocation2 + $0x8] sm:$0xf]
    %v39 = vld [vmem:[#allocation2 + $0xc] sm:$0xf]
    %v40 = vld [vmem:[%s2] sm:$0x1]
    %v42 = vperm.slane %v40, 0
    %v48 = vunpack.c.l.b16 %v36
    %v49 = vunpack.c.l.b16 %v37
    %v50 = vunpack.c.l.b16 %v38
    %v51 = vunpack.c.l.b16 %v39
    %v52 = vpack.c.b16 %v49, %v48
    %v53 = vpack.c.b16 %v51, %v50
    %vm56 = vcmask 261120
    %v58 = vsel %vm56, %v35, 0
    %60 = vmatpush.bf16.msra.mxu0 0
    %61 = vmatpush.bf16.msra.mxu0 0
    %62 = vmatpush.bf16.msra.mxu0 0
    %63 = vmatpush.bf16.msra.mxu0 0
    %64 = vmatpush.bf16.msra.mxu0 0
    %65 = vmatpush.bf16.msra.mxu0 0
    %66 = vmatpush.bf16.msra.mxu0 %v53
    %67 = vmatpush.bf16.msra.mxu0 %v52
    %68 = vmatmul.bf16.gmra.mxu0 %v58
    %v69 = vpop.f32.mrf.mxu0
    %v70 = vadd.f32 %v42, %v69
    %v71 = vpop.f32.mrf.mxu0
    %72 = vdwg.mxu0
    %vm73 = vcmask 367616
    %74 = vst.msk [vmem:[%s3] sm:$0xff] %vm73, %v70
    %76 = vrot.lane.b32.xlu0 %v70, 83
    %v77 = vpop.permute.xlu0 %76
    %vm79 = vcmask 293888
    %80 = vst.msk [vmem:[%s4] sm:$0xff] %vm79, %v77
    %v81 = vxor.u32 %v70, 2147483648
    %v82 = vmul.f32 %v81, 1.442695
    %v83 = vpow.pop %v82
    %v84 = vadd.f32 %v83, 1.0
    %v85 = vrcp.pop %v84
    %v86 = vmul.f32 %v84, %v85
    %v87 = vsub.f32 1.0, %v86
    %v88 = vmul.f32 %v85, %v87
    %v89 = vadd.f32 %v85, %v88
    %vm90 = vweird.f32 %v84
    %vm91 = vweird.f32 %v85
    %vm92 = vmor %vm90, %vm91
    %v93 = vsel %vm92, %v85, %v89
    %v94 = vand.u32 2147483647, %v84
    %vm95 = vcmp.eq.f32.partialorder %v94, 8.507059e+37
    %v96 = vand.u32 %v84, 2147483648
    %v97 = vor.u32 1.1754944e-38, %v96
    %v98 = vsel %vm95, %v97, %v93
    %v99 = vmul.f32 1.0, %v98
    %101 = vrot.lane.b32.xlu0 %v99, 47
    %v102 = vpop.permute.xlu0 %101
    %vm104 = vcmask 72704
    %105 = vst.msk [vmem:[#allocation5] sm:$0xff] %vm104, %v102
    // Predicated region
    $region18: #{_lambda_.1} parent=1 // pred_check
      _
    $region19: #{_lambda_.1} parent=1 // pred_check_branch
      %107 = sbr.rel (0) target = $region21
    $region20: #{_lambda_.1} parent=1 // pred_region
      _
    $region21: #{_lambda_.1} parent=1 // pred_fallthru
      _
    // Predicated region
    $region22: #{_lambda_.1} parent=1 // pred_check
      _
    $region23: #{_lambda_.1} parent=1 // pred_check_branch
      %109 = sbr.rel (0) target = $region25
    $region24: #{_lambda_.1} parent=1 // pred_region
      _
    $region25: #{_lambda_.1} parent=1 // pred_fallthru
      _
    // Predicated region
    $region26: #{_lambda_.1} parent=1 // pred_check
      _
    $region27: #{_lambda_.1} parent=1 // pred_check_branch
      %111 = sbr.rel (0) target = $region29
    $region28: #{_lambda_.1} parent=1 // pred_region
      %113 = vsyncadd [#allocation4], 0
      %s115 = sshll.u32 [#allocation5], 4
      %s116 = int_to_ptr.vmem [resolvable:$true] %s115
      %s117 = sshll.u32 %s5, 4
      %s118 = int_to_ptr.hbm [resolvable:$true] %s117
      %120 = dma.vmem_to_hbm [thread:$0]  %s116, 128, %s118, [#allocation4]
    $region29: #{_lambda_.1} parent=1 // pred_fallthru
      _
    // Predicated region
    $region30: #{_lambda_.1} parent=1 // pred_check
      _
    $region31: #{_lambda_.1} parent=1 // pred_check_branch
      %122 = sbr.rel (0) target = $region33
    $region32: #{_lambda_.1} parent=1 // pred_region
      _
    $region33: #{_lambda_.1} parent=1 // pred_fallthru
      _
    // Predicated region
    $region34: #{_lambda_.1} parent=1 // pred_check
      _
    $region35: #{_lambda_.1} parent=1 // pred_check_branch
      %124 = sbr.rel (0) target = $region37
    $region36: #{_lambda_.1} parent=1 // pred_region
      _
    $region37: #{_lambda_.1} parent=1 // pred_fallthru
      _
    // Predicated region
    $region38: #{_lambda_.1} parent=1 // pred_check
      _
    $region39: #{_lambda_.1} parent=1 // pred_check_branch
      %126 = sbr.rel (0) target = $region41
    $region40: #{_lambda_.1} parent=1 // pred_region
      %128 = dma.done [#allocation4], 128
    $region41: #{_lambda_.1} parent=1 // pred_fallthru
      _
    %129 = vsyncpa [#allocation3], 1
    %130 = vsyncpa [#allocation4], 1

</llo_original>
